<compile_context>
chip_gen: v6e
topology: v6e:2x2x1
jax: 0.10.0
libtpu: 0.0.40
codegen_flags: <defaults>
</compile_context>

<pallas_src>
import functools

import jax
import jax.numpy as jnp
from jax.experimental import pallas as pl
from jax.experimental.pallas import tpu as pltpu


def _round_up(n, m):
    return ((n + m - 1) // m) * m


def _mlp_kernel(x_ref, w1_ref, b1_ref, w2_ref, b2_ref, o_ref):
    # x: (TM, 128), w1: (128, 16), b1: (1, 16), w2: (16, 2), b2: (1, 2)
    x = x_ref[...]
    h = jnp.dot(x, w1_ref[...], preferred_element_type=jnp.float32) + b1_ref[...]
    h = jnp.maximum(h, 0.0)                      # ReLU
    # TODO(synk): Dropout(p=0.4) is a no-op in eval mode; train-mode masking
    # (via pltpu.prng_seed + pltpu.prng_random_bits) is not implemented.
    y = jnp.dot(h, w2_ref[...], preferred_element_type=jnp.float32) + b2_ref[...]
    o_ref[...] = jax.nn.sigmoid(y).astype(o_ref.dtype)


@functools.partial(jax.jit, static_argnames=("tm", "use_bf16_inputs"))
def generater_forward(x, w1, b1, w2, b2, *, tm=2048, use_bf16_inputs=False):
    """x: (B, 128) float32 -> (B, 2) float32.

    tm: batch tile size (rows per grid step). Clamped to the (8-aligned) batch
        for small inputs; batch is padded up to a multiple of tm and the pad
        rows are sliced off after the call.
    use_bf16_inputs: cast x/w1 to bf16 at the boundary to halve HBM read
        traffic (MXU still accumulates in f32).
    """
    B, D = x.shape
    tm = min(tm, _round_up(B, 8))
    B_pad = _round_up(B, tm)
    if B_pad != B:
        x = jnp.pad(x, ((0, B_pad - B), (0, 0)))

    if use_bf16_inputs:
        x = x.astype(jnp.bfloat16)
        w1 = w1.astype(jnp.bfloat16)

    grid = (B_pad // tm,)
    out = pl.pallas_call(
        _mlp_kernel,
        out_shape=jax.ShapeDtypeStruct((B_pad, 2), jnp.float32),
        grid=grid,
        in_specs=[
            pl.BlockSpec((tm, D), lambda i: (i, 0)),      # streamed x tile
            pl.BlockSpec(w1.shape, lambda i: (0, 0)),     # resident weights
            pl.BlockSpec(b1.shape, lambda i: (0, 0)),
            pl.BlockSpec(w2.shape, lambda i: (0, 0)),
            pl.BlockSpec(b2.shape, lambda i: (0, 0)),
        ],
        out_specs=pl.BlockSpec((tm, 2), lambda i: (i, 0)),
        compiler_params=pltpu.CompilerParams(
            dimension_semantics=("parallel",),
        ),
    )(x, w1, b1, w2, b2)
    return out[:B]


def init_params(key):
    """Deterministic parameter init matching the PyTorch module's shapes.

    nn.Linear(128,16): W1 (16,128), b1 (16); nn.Linear(16,2): W2 (2,16), b2 (2).
    Stored pre-transposed as (in, out) for the kernel.
    """
    k1, k2, k3, k4 = jax.random.split(key, 4)
    # uniform(-1/sqrt(fan_in), 1/sqrt(fan_in)), like PyTorch's default Linear init
    lim1 = 1.0 / jnp.sqrt(128.0)
    lim2 = 1.0 / jnp.sqrt(16.0)
    w1 = jax.random.uniform(k1, (128, 16), jnp.float32, -lim1, lim1)
    b1 = jax.random.uniform(k2, (1, 16), jnp.float32, -lim1, lim1)
    w2 = jax.random.uniform(k3, (16, 2), jnp.float32, -lim2, lim2)
    b2 = jax.random.uniform(k4, (1, 2), jnp.float32, -lim2, lim2)
    return w1, b1, w2, b2


def reference_forward(x, w1, b1, w2, b2):
    h = jnp.maximum(x @ w1 + b1, 0.0)
    return jax.nn.sigmoid(h @ w2 + b2)


if __name__ == "__main__":
    key = jax.random.PRNGKey(0)
    kx, kx2, kp = jax.random.split(key, 3)

    w1, b1, w2, b2 = init_params(kp)

    # Small case (matches the module's natural input: (B, 128)).
    B = 8
    x = jax.random.normal(kx, (B, 128), dtype=jnp.float32)
    out = generater_forward(x, w1, b1, w2, b2)
    out = jax.block_until_ready(out)
    ref = reference_forward(x, w1, b1, w2, b2)
    assert out.shape == (B, 2), out.shape
    assert jnp.allclose(out, ref, atol=1e-5, rtol=1e-5), "mismatch vs reference (B=8)"

    # Larger case exercising the batch grid + pad/slice path (B not a multiple of tm).
    B2 = 300
    x2 = jax.random.normal(kx2, (B2, 128), dtype=jnp.float32)
    out2 = generater_forward(x2, w1, b1, w2, b2, tm=128)
    out2 = jax.block_until_ready(out2)
    ref2 = reference_forward(x2, w1, b1, w2, b2)
    assert out2.shape == (B2, 2), out2.shape
    assert jnp.allclose(out2, ref2, atol=1e-5, rtol=1e-5), "mismatch vs reference (B=300)"

    print("KERNEL_OK")
</pallas_src>

<mosaic_0001>
module attributes {stable_mosaic.version = 11 : i64} {
  func.func @_mlp_kernel(%arg0: i32, %arg1: memref<8x128xf32, #tpu.memory_space<vmem>>, %arg2: memref<128x16xf32, #tpu.memory_space<vmem>>, %arg3: memref<1x16xf32, #tpu.memory_space<vmem>>, %arg4: memref<16x2xf32, #tpu.memory_space<vmem>>, %arg5: memref<1x2xf32, #tpu.memory_space<vmem>>, %arg6: memref<8x2xf32, #tpu.memory_space<vmem>>) attributes {dimension_semantics = [#tpu.dimension_semantics<parallel>], iteration_bounds = array<i64: 1>, scalar_prefetch = 0 : i64, scratch_operands = 0 : i64, tpu.core_type = #tpu.core_type<tc>, window_params = [{transform_indices = @transform_0, window_bounds = array<i64: 8, 128>}, {pipeline_mode = #tpu.pipeline_mode<synchronous>, transform_indices = @transform_1, window_bounds = array<i64: 128, 16>}, {pipeline_mode = #tpu.pipeline_mode<synchronous>, transform_indices = @transform_2, window_bounds = array<i64: 1, 16>}, {pipeline_mode = #tpu.pipeline_mode<synchronous>, transform_indices = @transform_3, window_bounds = array<i64: 16, 2>}, {pipeline_mode = #tpu.pipeline_mode<synchronous>, transform_indices = @transform_4, window_bounds = array<i64: 1, 2>}, {transform_indices = @transform_5, window_bounds = array<i64: 8, 2>}]} {
    %c0 = arith.constant 0 : index
    %c0_0 = arith.constant 0 : index
    %0 = vector.load %arg1[%c0, %c0_0] : memref<8x128xf32, #tpu.memory_space<vmem>>, vector<8x128xf32>
    %c0_1 = arith.constant 0 : index
    %c0_2 = arith.constant 0 : index
    %1 = vector.load %arg2[%c0_1, %c0_2] : memref<128x16xf32, #tpu.memory_space<vmem>>, vector<128x16xf32>
    %cst = arith.constant dense<0.000000e+00> : vector<8x16xf32>
    %2 = tpu.matmul %0, %1, %cst {dimension_numbers = #tpu.dot_dimension_numbers<[1], [0], [0], [1], [0, 0, 1, 1], [], []>} : vector<8x128xf32>, vector<128x16xf32>, vector<8x16xf32> -> vector<8x16xf32>
    %c0_3 = arith.constant 0 : index
    %c0_4 = arith.constant 0 : index
    %3 = vector.load %arg3[%c0_3, %c0_4] : memref<1x16xf32, #tpu.memory_space<vmem>>, vector<1x16xf32>
    %4 = vector.broadcast %3 : vector<1x16xf32> to vector<8x16xf32>
    %5 = arith.addf %2, %4 : vector<8x16xf32>
    %cst_5 = arith.constant 0.000000e+00 : f32
    %6 = vector.broadcast %cst_5 : f32 to vector<8x16xf32>
    %7 = arith.maximumf %5, %6 : vector<8x16xf32>
    %c0_6 = arith.constant 0 : index
    %c0_7 = arith.constant 0 : index
    %8 = vector.load %arg4[%c0_6, %c0_7] : memref<16x2xf32, #tpu.memory_space<vmem>>, vector<16x2xf32>
    %cst_8 = arith.constant dense<0.000000e+00> : vector<8x2xf32>
    %9 = tpu.matmul %7, %8, %cst_8 {dimension_numbers = #tpu.dot_dimension_numbers<[1], [0], [0], [1], [0, 0, 1, 1], [], []>} : vector<8x16xf32>, vector<16x2xf32>, vector<8x2xf32> -> vector<8x2xf32>
    %c0_9 = arith.constant 0 : index
    %c0_10 = arith.constant 0 : index
    %10 = vector.load %arg5[%c0_9, %c0_10] : memref<1x2xf32, #tpu.memory_space<vmem>>, vector<1x2xf32>
    %11 = vector.broadcast %10 : vector<1x2xf32> to vector<8x2xf32>
    %12 = arith.addf %9, %11 : vector<8x2xf32>
    %13 = arith.negf %12 : vector<8x2xf32>
    %14 = math.exp %13 : vector<8x2xf32>
    %cst_11 = arith.constant 1.000000e+00 : f32
    %15 = vector.broadcast %cst_11 : f32 to vector<8x2xf32>
    %16 = arith.addf %15, %14 : vector<8x2xf32>
    %17 = arith.divf %15, %16 : vector<8x2xf32>
    %c0_12 = arith.constant 0 : index
    %c0_13 = arith.constant 0 : index
    %18 = vector.load %arg6[%c0_12, %c0_13] : memref<8x2xf32, #tpu.memory_space<vmem>>, vector<8x2xf32>
    tpu.vector_store %arg6[%c0_12, %c0_13], %17 {strides = array<i32>} : memref<8x2xf32, #tpu.memory_space<vmem>>, vector<8x2xf32>,
    return
  }
  func.func @transform_0(%arg0: i32) -> (i32, i32) {
    %c0_i32 = arith.constant 0 : i32
    %c0_i32_0 = arith.constant 0 : i32
    return %arg0, %c0_i32 : i32, i32
  }
  func.func @transform_1(%arg0: i32) -> (i32, i32) {
    %c0_i32 = arith.constant 0 : i32
    %c0_i32_0 = arith.constant 0 : i32
    %c0_i32_1 = arith.constant 0 : i32
    return %c0_i32, %c0_i32_0 : i32, i32
  }
  func.func @transform_2(%arg0: i32) -> (i32, i32) {
    %c0_i32 = arith.constant 0 : i32
    %c0_i32_0 = arith.constant 0 : i32
    %c0_i32_1 = arith.constant 0 : i32
    return %c0_i32, %c0_i32_0 : i32, i32
  }
  func.func @transform_3(%arg0: i32) -> (i32, i32) {
    %c0_i32 = arith.constant 0 : i32
    %c0_i32_0 = arith.constant 0 : i32
    %c0_i32_1 = arith.constant 0 : i32
    return %c0_i32, %c0_i32_0 : i32, i32
  }
  func.func @transform_4(%arg0: i32) -> (i32, i32) {
    %c0_i32 = arith.constant 0 : i32
    %c0_i32_0 = arith.constant 0 : i32
    %c0_i32_1 = arith.constant 0 : i32
    return %c0_i32, %c0_i32_0 : i32, i32
  }
  func.func @transform_5(%arg0: i32) -> (i32, i32) {
    %c0_i32 = arith.constant 0 : i32
    %c0_i32_0 = arith.constant 0 : i32
    return %arg0, %c0_i32 : i32, i32
  }
}

</mosaic_0001>

<llo_original>
// kernel: generater_forward.1
$region0: #{generater_forward.1}
  #allocation0 [shape = 'u32[]', space=smem, size = 0x4, offset = 0x4, fixed_abs, tag = 'smem constant byte address 0x4 - core index']
  #allocation1 [shape = 'u32[144,128]{1,0:T(1,128)}', space=vmem, size = 0x12000, scoped, tag = 'internal scratch']
  %s0 = inlined_call_operand.vmem [shape: f32[8,128], index: 0, kind: input, shape index: {}]
  %s1 = inlined_call_operand.vmem [shape: f32[128,16], index: 1, kind: input, shape index: {}]
  %s2 = inlined_call_operand.vmem [shape: f32[1,16], index: 2, kind: input, shape index: {}]
  %s3 = inlined_call_operand.vmem [shape: f32[16,2], index: 3, kind: input, shape index: {}]
  %s4 = inlined_call_operand.vmem [shape: f32[1,2], index: 4, kind: input, shape index: {}]
  %s5 = inlined_call_operand.vmem [shape: f32[8,2], index: 5, kind: output, shape index: {}]
  %s6 = sld [smem:[#allocation0]]
  $region30: #{generater_forward.1} parent=0
    _
  %s8 = ssub.s32 1, %s6
  %s9 = scalar_select 0, %s8, %s6
  // Predicated region
  $region2: #{generater_forward.1} parent=0 // pred_check
    _
  $region3: #{generater_forward.1} parent=0 // pred_check_branch
    %11 = sbr.rel (0) target = $region5
  $region4: #{generater_forward.1} parent=0 // pred_region
    _
  $region5: #{generater_forward.1} parent=0 // pred_fallthru
    _
  // Predicated region
  $region6: #{generater_forward.1} parent=0 // pred_check
    _
  $region7: #{generater_forward.1} parent=0 // pred_check_branch
    %13 = sbr.rel (0) target = $region9
  $region8: #{generater_forward.1} parent=0 // pred_region
    _
  $region9: #{generater_forward.1} parent=0 // pred_fallthru
    _
  // Predicated region
  $region10: #{generater_forward.1} parent=0 // pred_check
    _
  $region11: #{generater_forward.1} parent=0 // pred_check_branch
    %15 = sbr.rel (0) target = $region13
  $region12: #{generater_forward.1} parent=0 // pred_region
    _
  $region13: #{generater_forward.1} parent=0 // pred_fallthru
    _
  // Predicated region
  $region14: #{generater_forward.1} parent=0 // pred_check
    _
  $region15: #{generater_forward.1} parent=0 // pred_check_branch
    %17 = sbr.rel (0) target = $region17
  $region16: #{generater_forward.1} parent=0 // pred_region
    _
  $region17: #{generater_forward.1} parent=0 // pred_fallthru
    _
  // Predicated region
  $region18: #{generater_forward.1} parent=0 // pred_check
    _
  $region19: #{generater_forward.1} parent=0 // pred_check_branch
    %19 = sbr.rel (0) target = $region21
  $region20: #{generater_forward.1} parent=0 // pred_region
    _
  $region21: #{generater_forward.1} parent=0 // pred_fallthru
    _
  %v20 = vld [vmem:[%s0] sm:$0xff]
  %v21 = vld [vmem:[%s1] sm:$0xff]
  %v22 = vld [vmem:[%s1 + $0x8] sm:$0xff]
  %v23 = vld [vmem:[%s1 + $0x10] sm:$0xff]
  %v24 = vld [vmem:[%s1 + $0x18] sm:$0xff]
  %v25 = vld [vmem:[%s1 + $0x20] sm:$0xff]
  %v26 = vld [vmem:[%s1 + $0x28] sm:$0xff]
  %v27 = vld [vmem:[%s1 + $0x30] sm:$0xff]
  %v28 = vld [vmem:[%s1 + $0x38] sm:$0xff]
  %v29 = vld [vmem:[%s1 + $0x40] sm:$0xff]
  %v30 = vld [vmem:[%s1 + $0x48] sm:$0xff]
  %v31 = vld [vmem:[%s1 + $0x50] sm:$0xff]
  %v32 = vld [vmem:[%s1 + $0x58] sm:$0xff]
  %v33 = vld [vmem:[%s1 + $0x60] sm:$0xff]
  %v34 = vld [vmem:[%s1 + $0x68] sm:$0xff]
  %v35 = vld [vmem:[%s1 + $0x70] sm:$0xff]
  %v36 = vld [vmem:[%s1 + $0x78] sm:$0xff]
  %v37 = vld [vmem:[%s2] sm:$0x1]
  %v39 = vlaneseq
  %v40 = vshrl.u32 %v39, 7
  %v41 = vsub.s32 0, %v40
  %v42 = vrot.slane %v37, %v41
  %44 = vmatprep.subr.mxu0 0.0
  %45 = vmatpush1.msra.mxu0 %v36
  %46 = vmatprep.subr.mxu0 0.0
  %47 = vmatpush1.msra.mxu0 %v35
  %48 = vmatprep.subr.mxu0 0.0
  %49 = vmatpush1.msra.mxu0 %v34
  %50 = vmatprep.subr.mxu0 0.0
  %51 = vmatpush1.msra.mxu0 %v33
  %52 = vmatprep.subr.mxu0 0.0
  %53 = vmatpush1.msra.mxu0 %v32
  %54 = vmatprep.subr.mxu0 0.0
  %55 = vmatpush1.msra.mxu0 %v31
  %56 = vmatprep.subr.mxu0 0.0
  %57 = vmatpush1.msra.mxu0 %v30
  %58 = vmatprep.subr.mxu0 0.0
  %59 = vmatpush1.msra.mxu0 %v29
  %60 = vmatprep.subr.mxu0 0.0
  %61 = vmatpush1.msra.mxu0 %v28
  %62 = vmatprep.subr.mxu0 0.0
  %63 = vmatpush1.msra.mxu0 %v27
  %64 = vmatprep.subr.mxu0 0.0
  %65 = vmatpush1.msra.mxu0 %v26
  %66 = vmatprep.subr.mxu0 0.0
  %67 = vmatpush1.msra.mxu0 %v25
  %68 = vmatprep.subr.mxu0 0.0
  %69 = vmatpush1.msra.mxu0 %v24
  %70 = vmatprep.subr.mxu0 0.0
  %71 = vmatpush1.msra.mxu0 %v23
  %72 = vmatprep.subr.mxu0 0.0
  %73 = vmatpush1.msra.mxu0 %v22
  %74 = vmatprep.subr.mxu0 0.0
  %75 = vmatpush1.msra.mxu0 %v21
  %76 = vmatprep.subr.mxu0 0.0
  %77 = vmatpush2.msra.mxu0 0.0
  %78 = vmatprep.subr.mxu0 0.0
  %79 = vmatpush2.msra.mxu0 0.0
  %80 = vmatprep.subr.mxu0 0.0
  %81 = vmatpush2.msra.mxu0 0.0
  %82 = vmatprep.subr.mxu0 0.0
  %83 = vmatpush2.msra.mxu0 0.0
  %84 = vmatprep.subr.mxu0 0.0
  %85 = vmatpush2.msra.mxu0 0.0
  %86 = vmatprep.subr.mxu0 0.0
  %87 = vmatpush2.msra.mxu0 0.0
  %88 = vmatprep.subr.mxu0 0.0
  %89 = vmatpush2.msra.mxu0 0.0
  %90 = vmatprep.subr.mxu0 0.0
  %91 = vmatpush2.msra.mxu0 0.0
  %92 = vmatprep.subr.mxu0 0.0
  %93 = vmatpush2.msra.mxu0 0.0
  %94 = vmatprep.subr.mxu0 0.0
  %95 = vmatpush2.msra.mxu0 0.0
  %96 = vmatprep.subr.mxu0 0.0
  %97 = vmatpush2.msra.mxu0 0.0
  %98 = vmatprep.subr.mxu0 0.0
  %99 = vmatpush2.msra.mxu0 0.0
  %100 = vmatprep.subr.mxu0 0.0
  %101 = vmatpush2.msra.mxu0 0.0
  %102 = vmatprep.subr.mxu0 0.0
  %103 = vmatpush2.msra.mxu0 0.0
  %104 = vmatprep.subr.mxu0 0.0
  %105 = vmatpush2.msra.mxu0 0.0
  %106 = vmatprep.subr.mxu0 0.0
  %107 = vmatpush2.msra.mxu0 0.0
  %108 = vmatprep.mubr.f32.mxu0 0.0
  %109 = vmatmul.mubr.f32.gmra.mxu0 %v20
  %v110 = vpop.f32.mrf.mxu0
  %v111 = vadd.f32 %v42, %v110
  %v112 = vpop.f32.mrf.mxu0
  %113 = vdwg.mxu0
  %v114 = vmax.f32 %v111, 0.0
  %v115 = vld [vmem:[%s3] sm:$0xff]
  %v116 = vld [vmem:[%s3 + $0x8] sm:$0xff]
  %v117 = vld [vmem:[%s4] sm:$0x1]
  %v119 = vlaneseq
  %v120 = vshrl.u32 %v119, 7
  %v121 = vsub.s32 0, %v120
  %v122 = vrot.slane %v117, %v121
  %vm124 = vcmask 130048
  %v126 = vsel %vm124, %v114, 0
  %128 = vmatprep.subr.mxu0 0.0
  %129 = vmatpush1.msra.mxu0 0.0
  %130 = vmatprep.subr.mxu0 0.0
  %131 = vmatpush1.msra.mxu0 0.0
  %132 = vmatprep.subr.mxu0 0.0
  %133 = vmatpush1.msra.mxu0 0.0
  %134 = vmatprep.subr.mxu0 0.0
  %135 = vmatpush1.msra.mxu0 0.0
  %136 = vmatprep.subr.mxu0 0.0
  %137 = vmatpush1.msra.mxu0 0.0
  %138 = vmatprep.subr.mxu0 0.0
  %139 = vmatpush1.msra.mxu0 0.0
  %140 = vmatprep.subr.mxu0 0.0
  %141 = vmatpush1.msra.mxu0 0.0
  %142 = vmatprep.subr.mxu0 0.0
  %143 = vmatpush1.msra.mxu0 0.0
  %144 = vmatprep.subr.mxu0 0.0
  %145 = vmatpush1.msra.mxu0 0.0
  %146 = vmatprep.subr.mxu0 0.0
  %147 = vmatpush1.msra.mxu0 0.0
  %148 = vmatprep.subr.mxu0 0.0
  %149 = vmatpush1.msra.mxu0 0.0
  %150 = vmatprep.subr.mxu0 0.0
  %151 = vmatpush1.msra.mxu0 0.0
  %152 = vmatprep.subr.mxu0 0.0
  %153 = vmatpush1.msra.mxu0 0.0
  %154 = vmatprep.subr.mxu0 0.0
  %155 = vmatpush1.msra.mxu0 0.0
  %156 = vmatprep.subr.mxu0 0.0
  %157 = vmatpush1.msra.mxu0 %v116
  %158 = vmatprep.subr.mxu0 0.0
  %159 = vmatpush1.msra.mxu0 %v115
  %160 = vmatprep.subr.mxu0 0.0
  %161 = vmatpush2.msra.mxu0 0.0
  %162 = vmatprep.subr.mxu0 0.0
  %163 = vmatpush2.msra.mxu0 0.0
  %164 = vmatprep.subr.mxu0 0.0
  %165 = vmatpush2.msra.mxu0 0.0
  %166 = vmatprep.subr.mxu0 0.0
  %167 = vmatpush2.msra.mxu0 0.0
  %168 = vmatprep.subr.mxu0 0.0
  %169 = vmatpush2.msra.mxu0 0.0
  %170 = vmatprep.subr.mxu0 0.0
  %171 = vmatpush2.msra.mxu0 0.0
  %172 = vmatprep.subr.mxu0 0.0
  %173 = vmatpush2.msra.mxu0 0.0
  %174 = vmatprep.subr.mxu0 0.0
  %175 = vmatpush2.msra.mxu0 0.0
  %176 = vmatprep.subr.mxu0 0.0
  %177 = vmatpush2.msra.mxu0 0.0
  %178 = vmatprep.subr.mxu0 0.0
  %179 = vmatpush2.msra.mxu0 0.0
  %180 = vmatprep.subr.mxu0 0.0
  %181 = vmatpush2.msra.mxu0 0.0
  %182 = vmatprep.subr.mxu0 0.0
  %183 = vmatpush2.msra.mxu0 0.0
  %184 = vmatprep.subr.mxu0 0.0
  %185 = vmatpush2.msra.mxu0 0.0
  %186 = vmatprep.subr.mxu0 0.0
  %187 = vmatpush2.msra.mxu0 0.0
  %188 = vmatprep.subr.mxu0 0.0
  %189 = vmatpush2.msra.mxu0 0.0
  %190 = vmatprep.subr.mxu0 0.0
  %191 = vmatpush2.msra.mxu0 0.0
  %192 = vmatprep.mubr.f32.mxu0 0.0
  %193 = vmatmul.mubr.f32.gmra.mxu0 %v126
  %v194 = vpop.f32.mrf.mxu0
  %v195 = vadd.f32 %v122, %v194
  %v196 = vpop.f32.mrf.mxu0
  %197 = vdwg.mxu0
  %v198 = vxor.u32 %v195, 2147483648
  %v199 = vmul.f32 %v198, 1.442695
  %v200 = vpow.pop %v199
  %v201 = vadd.f32 %v200, 1.0
  %v202 = vrcp.pop %v201
  %v203 = vmul.f32 1.0, %v202
  %vm204 = vcmask 15360
  %205 = vst.msk [vmem:[%s5] sm:$0xff] %vm204, %v203
  // Predicated region
  $region22: #{generater_forward.1} parent=0 // pred_check
    _
  $region23: #{generater_forward.1} parent=0 // pred_check_branch
    %207 = sbr.rel (0) target = $region25
  $region24: #{generater_forward.1} parent=0 // pred_region
    _
  $region25: #{generater_forward.1} parent=0 // pred_fallthru
    _
  // Predicated region
  $region26: #{generater_forward.1} parent=0 // pred_check
    _
  $region27: #{generater_forward.1} parent=0 // pred_check_branch
    %209 = sbr.rel (0) target = $region29
  $region28: #{generater_forward.1} parent=0 // pred_region
    _
  $region29: #{generater_forward.1} parent=0 // pred_fallthru
    _

</llo_original>
